<compile_context>
chip_gen: v7x
topology: tpu7x:2x2x1
jax: 0.10.0
libtpu: 0.0.40
codegen_flags: <defaults>
</compile_context>

<pallas_src>
import jax
import jax.numpy as jnp
from jax.experimental import pallas as pl
from jax.experimental.pallas import tpu as pltpu

H_EMB = 16
H_CORE = 256


def _stim2emg_kernel(x_ref, w1_ref, b1_ref, w2_ref, b2_ref, w3_ref, b3_ref,
                     y_ref, h_ref):
    cdt = w1_ref.dtype  # MXU operand dtype; accumulation stays float32
    # emb: Linear + ReLU
    h1 = jnp.dot(x_ref[...].astype(cdt), w1_ref[...],
                 preferred_element_type=jnp.float32)
    h1 = jnp.maximum(h1 + b1_ref[...], 0.0)
    # core: Linear + ReLU (dropout is a no-op in eval mode)
    h2 = jnp.dot(h1.astype(cdt), w2_ref[...],
                 preferred_element_type=jnp.float32)
    h2 = jnp.maximum(h2 + b2_ref[...], 0.0)
    h_ref[...] = h2.astype(h_ref.dtype)
    # readout: Linear (identity activation)
    y = jnp.dot(h2.astype(cdt), w3_ref[...],
                preferred_element_type=jnp.float32)
    y_ref[...] = (y + b3_ref[...]).astype(y_ref.dtype)


def stim2emg_forward(x, params, *, block_b=1024, compute_dtype=jnp.bfloat16,
                     h_dtype=jnp.float32):
    """Fused emb -> core -> readout forward. Returns (y_pred, h)."""
    w1, b1, w2, b2, w3, b3 = params
    B, d_in = x.shape
    d_out = w3.shape[1]

    # --- batch tile selection -------------------------------------------------
    # (block_shape batch dim must be 8-aligned unless it equals the full B.)
    tb = min(block_b, B)
    if tb < B:
        tb = max(8, (tb // 8) * 8)
    elif B >= 1024:
        # Large batch fits one block: still split into 2 grid steps so the
        # "parallel" axis can be sharded across v7x's two TensorCores.
        tb = ((-(-B // 2) + 7) // 8) * 8
    grid = (pl.cdiv(B, tb),)

    # --- MXU operand dtype: cast weights once here, not per grid step ---------
    w1c = w1.astype(compute_dtype)
    w2c = w2.astype(compute_dtype)
    w3c = w3.astype(compute_dtype)
    b1c = b1.astype(jnp.float32)
    b2c = b2.astype(jnp.float32)
    b3c = b3.astype(jnp.float32)

    # Weights/biases are tiny: keep them fully VMEM-resident (no pipelining,
    # no double-buffering).
    def vmem_resident():
        return pl.BlockSpec(memory_space=pltpu.MemorySpace.VMEM)

    # --- explicit scoped-VMEM budget (defaults: 16 MiB v5e / 32 MiB v6e,v7x) --
    h_bytes = jnp.dtype(h_dtype).itemsize
    c_bytes = jnp.dtype(compute_dtype).itemsize
    tile_bytes = tb * (d_in * 4 + H_CORE * h_bytes + d_out * 4)
    weight_bytes = ((d_in * H_EMB + H_EMB * H_CORE + H_CORE * d_out) * c_bytes
                    + (H_EMB + H_CORE + d_out) * 4)
    vmem_limit = int(min(64 << 20,                       # v7x physical VMEM cap
                         max(32 << 20,
                             2 * tile_bytes + weight_bytes + (2 << 20))))

    return pl.pallas_call(
        _stim2emg_kernel,
        out_shape=(
            jax.ShapeDtypeStruct((B, d_out), jnp.float32),
            jax.ShapeDtypeStruct((B, H_CORE), h_dtype),
        ),
        grid_spec=pltpu.PrefetchScalarGridSpec(
            num_scalar_prefetch=0,
            grid=grid,
            in_specs=[
                pl.BlockSpec((tb, d_in), lambda i: (i, 0)),   # x tile over batch
                vmem_resident(),   # w1
                vmem_resident(),   # b1
                vmem_resident(),   # w2
                vmem_resident(),   # b2
                vmem_resident(),   # w3
                vmem_resident(),   # b3
            ],
            out_specs=[
                pl.BlockSpec((tb, d_out), lambda i: (i, 0)),
                pl.BlockSpec((tb, H_CORE), lambda i: (i, 0)),
            ],
        ),
        compiler_params=pltpu.CompilerParams(
            dimension_semantics=("parallel",),
            vmem_limit_bytes=vmem_limit),
    )(x, w1c, b1c, w2c, b2c, w3c, b3c)


def init_params(key, d_in, d_out):
    """Deterministic synthetic init (shapes mirror the PyTorch module)."""
    k1, k2, k3 = jax.random.split(key, 3)
    w1 = jax.random.normal(k1, (d_in, H_EMB), jnp.float32) * 0.1
    b1 = jnp.full((1, H_EMB), 0.01, jnp.float32)
    w2 = jax.random.normal(k2, (H_EMB, H_CORE), jnp.float32) * 0.1
    b2 = jnp.full((1, H_CORE), 0.02, jnp.float32)
    w3 = jax.random.normal(k3, (H_CORE, d_out), jnp.float32) * 0.1
    b3 = jnp.full((1, d_out), 0.03, jnp.float32)
    return (w1, b1, w2, b2, w3, b3)


def _reference_forward(x, params, compute_dtype=jnp.float32):
    """Pure-JAX reference; compute_dtype mirrors the kernel's MXU operand cast."""
    w1, b1, w2, b2, w3, b3 = params
    c = compute_dtype
    h1 = jnp.maximum(jnp.dot(x.astype(c), w1.astype(c),
                             preferred_element_type=jnp.float32) + b1, 0.0)
    h2 = jnp.maximum(jnp.dot(h1.astype(c), w2.astype(c),
                             preferred_element_type=jnp.float32) + b2, 0.0)
    y = jnp.dot(h2.astype(c), w3.astype(c),
                preferred_element_type=jnp.float32) + b3
    return y, h2


if __name__ == "__main__":
    key = jax.random.PRNGKey(0)
    kx, kp = jax.random.split(key)

    B, D_IN, D_OUT = 256, 16, 32     # meta['input_dims']=16, meta['output_dims']=32
    x = jax.random.normal(kx, (B, D_IN), jnp.float32)
    params = init_params(kp, D_IN, D_OUT)

    y_ref32, h_ref32 = _reference_forward(x, params)                  # pure f32
    y_ref16, h_ref16 = _reference_forward(x, params, jnp.bfloat16)    # bf16 MXU operands

    # 1) Bit-faithful f32 path (single batch block).
    y32, h32 = stim2emg_forward(x, params, compute_dtype=jnp.float32)
    jax.block_until_ready((y32, h32))
    assert y32.shape == (B, D_OUT) and h32.shape == (B, H_CORE)
    assert jnp.allclose(y32, y_ref32, atol=1e-4, rtol=1e-4)
    assert jnp.allclose(h32, h_ref32, atol=1e-4, rtol=1e-4)

    # 2) Default bf16-operand path, forcing a multi-step pipelined grid.
    y16, h16 = stim2emg_forward(x, params, block_b=128)
    jax.block_until_ready((y16, h16))
    assert jnp.allclose(y16, y_ref16, atol=2e-3, rtol=2e-3)
    assert jnp.allclose(h16, h_ref16, atol=2e-3, rtol=2e-3)
    assert jnp.allclose(y16, y_ref32, atol=5e-2, rtol=5e-2)
    assert jnp.allclose(h16, h_ref32, atol=5e-2, rtol=5e-2)

    # 3) Optional reduced-precision h writeback (halves the dominant HBM stream).
    y_b, h_b16 = stim2emg_forward(x, params, h_dtype=jnp.bfloat16)
    jax.block_until_ready((y_b, h_b16))
    assert h_b16.dtype == jnp.bfloat16
    assert jnp.allclose(h_b16.astype(jnp.float32), h_ref32, atol=5e-2, rtol=5e-2)

    print("KERNEL_OK")
</pallas_src>

<mosaic_0001>
module attributes {stable_mosaic.version = 11 : i64} {
  func.func @_stim2emg_kernel(%arg0: i32, %arg1: memref<256x16xf32, #tpu.memory_space<vmem>>, %arg2: memref<16x16xf32, #tpu.memory_space<vmem>>, %arg3: memref<1x16xf32, #tpu.memory_space<vmem>>, %arg4: memref<16x256xf32, #tpu.memory_space<vmem>>, %arg5: memref<1x256xf32, #tpu.memory_space<vmem>>, %arg6: memref<256x32xf32, #tpu.memory_space<vmem>>, %arg7: memref<1x32xf32, #tpu.memory_space<vmem>>, %arg8: memref<256x32xf32, #tpu.memory_space<vmem>>, %arg9: memref<256x256xf32, #tpu.memory_space<vmem>>) attributes {dimension_semantics = [#tpu.dimension_semantics<parallel>], iteration_bounds = array<i64: 1>, scalar_prefetch = 0 : i64, scratch_operands = 0 : i64, tpu.core_type = #tpu.core_type<tc>, window_params = [{transform_indices = @transform_0, window_bounds = array<i64: 256, 16>}, {pipeline_mode = #tpu.pipeline_mode<synchronous>, transform_indices = @transform_1, window_bounds = array<i64: 16, 16>}, {pipeline_mode = #tpu.pipeline_mode<synchronous>, transform_indices = @transform_2, window_bounds = array<i64: 1, 16>}, {pipeline_mode = #tpu.pipeline_mode<synchronous>, transform_indices = @transform_3, window_bounds = array<i64: 16, 256>}, {pipeline_mode = #tpu.pipeline_mode<synchronous>, transform_indices = @transform_4, window_bounds = array<i64: 1, 256>}, {pipeline_mode = #tpu.pipeline_mode<synchronous>, transform_indices = @transform_5, window_bounds = array<i64: 256, 32>}, {pipeline_mode = #tpu.pipeline_mode<synchronous>, transform_indices = @transform_6, window_bounds = array<i64: 1, 32>}, {transform_indices = @transform_7, window_bounds = array<i64: 256, 32>}, {transform_indices = @transform_8, window_bounds = array<i64: 256, 256>}]} {
    %c0 = arith.constant 0 : index
    %c0_0 = arith.constant 0 : index
    %0 = vector.load %arg1[%c0, %c0_0] : memref<256x16xf32, #tpu.memory_space<vmem>>, vector<256x16xf32>
    %c0_1 = arith.constant 0 : index
    %c0_2 = arith.constant 0 : index
    %1 = vector.load %arg2[%c0_1, %c0_2] : memref<16x16xf32, #tpu.memory_space<vmem>>, vector<16x16xf32>
    %cst = arith.constant dense<0.000000e+00> : vector<256x16xf32>
    %2 = tpu.matmul %0, %1, %cst {dimension_numbers = #tpu.dot_dimension_numbers<[1], [0], [0], [1], [0, 0, 1, 1], [], []>} : vector<256x16xf32>, vector<16x16xf32>, vector<256x16xf32> -> vector<256x16xf32>
    %c0_3 = arith.constant 0 : index
    %c0_4 = arith.constant 0 : index
    %3 = vector.load %arg3[%c0_3, %c0_4] : memref<1x16xf32, #tpu.memory_space<vmem>>, vector<1x16xf32>
    %4 = vector.broadcast %3 : vector<1x16xf32> to vector<256x16xf32>
    %5 = arith.addf %2, %4 : vector<256x16xf32>
    %cst_5 = arith.constant 0.000000e+00 : f32
    %6 = vector.broadcast %cst_5 : f32 to vector<256x16xf32>
    %7 = arith.maximumf %5, %6 : vector<256x16xf32>
    %c0_6 = arith.constant 0 : index
    %c0_7 = arith.constant 0 : index
    %8 = vector.load %arg4[%c0_6, %c0_7] : memref<16x256xf32, #tpu.memory_space<vmem>>, vector<16x256xf32>
    %cst_8 = arith.constant dense<0.000000e+00> : vector<256x256xf32>
    %9 = tpu.matmul %7, %8, %cst_8 {dimension_numbers = #tpu.dot_dimension_numbers<[1], [0], [0], [1], [0, 0, 1, 1], [], []>} : vector<256x16xf32>, vector<16x256xf32>, vector<256x256xf32> -> vector<256x256xf32>
    %c0_9 = arith.constant 0 : index
    %c0_10 = arith.constant 0 : index
    %10 = vector.load %arg5[%c0_9, %c0_10] : memref<1x256xf32, #tpu.memory_space<vmem>>, vector<1x256xf32>
    %11 = vector.broadcast %10 : vector<1x256xf32> to vector<256x256xf32>
    %12 = arith.addf %9, %11 : vector<256x256xf32>
    %cst_11 = arith.constant 0.000000e+00 : f32
    %13 = vector.broadcast %cst_11 : f32 to vector<256x256xf32>
    %14 = arith.maximumf %12, %13 : vector<256x256xf32>
    %c0_12 = arith.constant 0 : index
    %c0_13 = arith.constant 0 : index
    %15 = vector.load %arg9[%c0_12, %c0_13] : memref<256x256xf32, #tpu.memory_space<vmem>>, vector<256x256xf32>
    tpu.vector_store %arg9[%c0_12, %c0_13], %14 {strides = array<i32>} : memref<256x256xf32, #tpu.memory_space<vmem>>, vector<256x256xf32>,
    %c0_14 = arith.constant 0 : index
    %c0_15 = arith.constant 0 : index
    %16 = vector.load %arg6[%c0_14, %c0_15] : memref<256x32xf32, #tpu.memory_space<vmem>>, vector<256x32xf32>
    %cst_16 = arith.constant dense<0.000000e+00> : vector<256x32xf32>
    %17 = tpu.matmul %14, %16, %cst_16 {dimension_numbers = #tpu.dot_dimension_numbers<[1], [0], [0], [1], [0, 0, 1, 1], [], []>} : vector<256x256xf32>, vector<256x32xf32>, vector<256x32xf32> -> vector<256x32xf32>
    %c0_17 = arith.constant 0 : index
    %c0_18 = arith.constant 0 : index
    %18 = vector.load %arg7[%c0_17, %c0_18] : memref<1x32xf32, #tpu.memory_space<vmem>>, vector<1x32xf32>
    %19 = vector.broadcast %18 : vector<1x32xf32> to vector<256x32xf32>
    %20 = arith.addf %17, %19 : vector<256x32xf32>
    %c0_19 = arith.constant 0 : index
    %c0_20 = arith.constant 0 : index
    %21 = vector.load %arg8[%c0_19, %c0_20] : memref<256x32xf32, #tpu.memory_space<vmem>>, vector<256x32xf32>
    tpu.vector_store %arg8[%c0_19, %c0_20], %20 {strides = array<i32>} : memref<256x32xf32, #tpu.memory_space<vmem>>, vector<256x32xf32>,
    return
  }
  func.func @transform_0(%arg0: i32) -> (i32, i32) {
    %c0_i32 = arith.constant 0 : i32
    %c0_i32_0 = arith.constant 0 : i32
    return %arg0, %c0_i32 : i32, i32
  }
  func.func @transform_1(%arg0: i32) -> (i32, i32) {
    %c0_i32 = arith.constant 0 : i32
    %c0_i32_0 = arith.constant 0 : i32
    %c0_i32_1 = arith.constant 0 : i32
    return %c0_i32, %c0_i32_0 : i32, i32
  }
  func.func @transform_2(%arg0: i32) -> (i32, i32) {
    %c0_i32 = arith.constant 0 : i32
    %c0_i32_0 = arith.constant 0 : i32
    %c0_i32_1 = arith.constant 0 : i32
    return %c0_i32, %c0_i32_0 : i32, i32
  }
  func.func @transform_3(%arg0: i32) -> (i32, i32) {
    %c0_i32 = arith.constant 0 : i32
    %c0_i32_0 = arith.constant 0 : i32
    %c0_i32_1 = arith.constant 0 : i32
    return %c0_i32, %c0_i32_0 : i32, i32
  }
  func.func @transform_4(%arg0: i32) -> (i32, i32) {
    %c0_i32 = arith.constant 0 : i32
    %c0_i32_0 = arith.constant 0 : i32
    %c0_i32_1 = arith.constant 0 : i32
    return %c0_i32, %c0_i32_0 : i32, i32
  }
  func.func @transform_5(%arg0: i32) -> (i32, i32) {
    %c0_i32 = arith.constant 0 : i32
    %c0_i32_0 = arith.constant 0 : i32
    %c0_i32_1 = arith.constant 0 : i32
    return %c0_i32, %c0_i32_0 : i32, i32
  }
  func.func @transform_6(%arg0: i32) -> (i32, i32) {
    %c0_i32 = arith.constant 0 : i32
    %c0_i32_0 = arith.constant 0 : i32
    %c0_i32_1 = arith.constant 0 : i32
    return %c0_i32, %c0_i32_0 : i32, i32
  }
  func.func @transform_7(%arg0: i32) -> (i32, i32) {
    %c0_i32 = arith.constant 0 : i32
    %c0_i32_0 = arith.constant 0 : i32
    return %arg0, %c0_i32 : i32, i32
  }
  func.func @transform_8(%arg0: i32) -> (i32, i32) {
    %c0_i32 = arith.constant 0 : i32
    %c0_i32_0 = arith.constant 0 : i32
    return %arg0, %c0_i32 : i32, i32
  }
}

</mosaic_0001>

<llo_original>
// kernel: tpu_custom_call.1
$region0: #{tpu_custom_call.1}
  #allocation0 [shape = 'u32[]', space=smem, size = 0x4, offset = 0x4, fixed_abs, tag = 'smem constant byte address 0x4 - core index']
  #allocation1 [shape = 'u32[144,128]{1,0:T(1,128)}', space=vmem, size = 0x12000, scoped, tag = 'internal scratch']
  %s0 = inlined_call_operand.vmem [shape: f32[256,16], index: 0, kind: input, shape index: {}]
  %s1 = inlined_call_operand.vmem [shape: f32[16,16], index: 1, kind: input, shape index: {}]
  %s2 = inlined_call_operand.vmem [shape: f32[1,16], index: 2, kind: input, shape index: {}]
  %s3 = inlined_call_operand.vmem [shape: f32[16,256], index: 3, kind: input, shape index: {}]
  %s4 = inlined_call_operand.vmem [shape: f32[1,256], index: 4, kind: input, shape index: {}]
  %s5 = inlined_call_operand.vmem [shape: f32[256,32], index: 5, kind: input, shape index: {}]
  %s6 = inlined_call_operand.vmem [shape: f32[1,32], index: 6, kind: input, shape index: {}]
  %s7 = inlined_call_operand.vmem [shape: f32[256,32], index: 7, kind: output, shape index: {0}]
  %s8 = inlined_call_operand.hbm [shape: f32[256,256], index: 8, kind: output, shape index: {1}]
  %9 = xla_tuple %s7, %s8
  %s10 = sld [smem:[#allocation0]]
  $region46: #{tpu_custom_call.1} parent=0
    _
  %s12 = ssub.s32 1, %s10
  %s13 = scalar_select 0, %s12, %s10
  $region1: #{tpu_custom_call.1} parent=0
    #allocation2 [shape = 'u8[262144]{0}', space=vmem, size = 0x40000, scoped, tag = 'output window, operand 1, single buffered']
    #allocation3 [shape = 's32[1]{0}', space=sflag, size = 0x4, scoped, tag = 'scoped memory for tpu_custom_call.1']
    %14 = vsyncpa [#allocation3], 0
    // Predicated region
    $region2: #{tpu_custom_call.1} parent=1 // pred_check
      _
    $region3: #{tpu_custom_call.1} parent=1 // pred_check_branch
      %16 = sbr.rel (0) target = $region5
    $region4: #{tpu_custom_call.1} parent=1 // pred_region
      _
    $region5: #{tpu_custom_call.1} parent=1 // pred_fallthru
      _
    // Predicated region
    $region6: #{tpu_custom_call.1} parent=1 // pred_check
      _
    $region7: #{tpu_custom_call.1} parent=1 // pred_check_branch
      %18 = sbr.rel (0) target = $region9
    $region8: #{tpu_custom_call.1} parent=1 // pred_region
      _
    $region9: #{tpu_custom_call.1} parent=1 // pred_fallthru
      _
    // Predicated region
    $region10: #{tpu_custom_call.1} parent=1 // pred_check
      _
    $region11: #{tpu_custom_call.1} parent=1 // pred_check_branch
      %20 = sbr.rel (0) target = $region13
    $region12: #{tpu_custom_call.1} parent=1 // pred_region
      _
    $region13: #{tpu_custom_call.1} parent=1 // pred_fallthru
      _
    // Predicated region
    $region14: #{tpu_custom_call.1} parent=1 // pred_check
      _
    $region15: #{tpu_custom_call.1} parent=1 // pred_check_branch
      %22 = sbr.rel (0) target = $region17
    $region16: #{tpu_custom_call.1} parent=1 // pred_region
      _
    $region17: #{tpu_custom_call.1} parent=1 // pred_fallthru
      _
    // Predicated region
    $region18: #{tpu_custom_call.1} parent=1 // pred_check
      _
    $region19: #{tpu_custom_call.1} parent=1 // pred_check_branch
      %24 = sbr.rel (0) target = $region21
    $region20: #{tpu_custom_call.1} parent=1 // pred_region
      _
    $region21: #{tpu_custom_call.1} parent=1 // pred_fallthru
      _
    // Predicated region
    $region22: #{tpu_custom_call.1} parent=1 // pred_check
      _
    $region23: #{tpu_custom_call.1} parent=1 // pred_check_branch
      %26 = sbr.rel (0) target = $region25
    $region24: #{tpu_custom_call.1} parent=1 // pred_region
      _
    $region25: #{tpu_custom_call.1} parent=1 // pred_fallthru
      _
    // Predicated region
    $region26: #{tpu_custom_call.1} parent=1 // pred_check
      _
    $region27: #{tpu_custom_call.1} parent=1 // pred_check_branch
      %28 = sbr.rel (0) target = $region29
    $region28: #{tpu_custom_call.1} parent=1 // pred_region
      _
    $region29: #{tpu_custom_call.1} parent=1 // pred_fallthru
      _
    %v29 = vld [vmem:[%s0] sm:$0xff]
    %v30 = vld [vmem:[%s0 + $0x8] sm:$0xff]
    %v31 = vld [vmem:[%s0 + $0x10] sm:$0xff]
    %v32 = vld [vmem:[%s0 + $0x18] sm:$0xff]
    %v33 = vld [vmem:[%s0 + $0x20] sm:$0xff]
    %v34 = vld [vmem:[%s0 + $0x28] sm:$0xff]
    %v35 = vld [vmem:[%s0 + $0x30] sm:$0xff]
    %v36 = vld [vmem:[%s0 + $0x38] sm:$0xff]
    %v37 = vld [vmem:[%s0 + $0x40] sm:$0xff]
    %v38 = vld [vmem:[%s0 + $0x48] sm:$0xff]
    %v39 = vld [vmem:[%s0 + $0x50] sm:$0xff]
    %v40 = vld [vmem:[%s0 + $0x58] sm:$0xff]
    %v41 = vld [vmem:[%s0 + $0x60] sm:$0xff]
    %v42 = vld [vmem:[%s0 + $0x68] sm:$0xff]
    %v43 = vld [vmem:[%s0 + $0x70] sm:$0xff]
    %v44 = vld [vmem:[%s0 + $0x78] sm:$0xff]
    %v45 = vld [vmem:[%s0 + $0x80] sm:$0xff]
    %v46 = vld [vmem:[%s0 + $0x88] sm:$0xff]
    %v47 = vld [vmem:[%s0 + $0x90] sm:$0xff]
    %v48 = vld [vmem:[%s0 + $0x98] sm:$0xff]
    %v49 = vld [vmem:[%s0 + $0xa0] sm:$0xff]
    %v50 = vld [vmem:[%s0 + $0xa8] sm:$0xff]
    %v51 = vld [vmem:[%s0 + $0xb0] sm:$0xff]
    %v52 = vld [vmem:[%s0 + $0xb8] sm:$0xff]
    %v53 = vld [vmem:[%s0 + $0xc0] sm:$0xff]
    %v54 = vld [vmem:[%s0 + $0xc8] sm:$0xff]
    %v55 = vld [vmem:[%s0 + $0xd0] sm:$0xff]
    %v56 = vld [vmem:[%s0 + $0xd8] sm:$0xff]
    %v57 = vld [vmem:[%s0 + $0xe0] sm:$0xff]
    %v58 = vld [vmem:[%s0 + $0xe8] sm:$0xff]
    %v59 = vld [vmem:[%s0 + $0xf0] sm:$0xff]
    %v60 = vld [vmem:[%s0 + $0xf8] sm:$0xff]
    %v61 = vld [vmem:[%s1] sm:$0xff]
    %v62 = vld [vmem:[%s1 + $0x8] sm:$0xff]
    %v63 = vld [vmem:[%s2] sm:$0x1]
    %v65 = vlaneseq
    %v66 = vshrl.u32 %v65, 7
    %v67 = vsub.s32 0, %v66
    %v68 = vrot.slane %v63, %v67
    %vm70 = vcmask 130048
    %v72 = vsel %vm70, %v29, 0
    %v75 = vsel %vm70, %v30, 0
    %v78 = vsel %vm70, %v31, 0
    %v81 = vsel %vm70, %v32, 0
    %v84 = vsel %vm70, %v33, 0
    %v87 = vsel %vm70, %v34, 0
    %v90 = vsel %vm70, %v35, 0
    %v93 = vsel %vm70, %v36, 0
    %v96 = vsel %vm70, %v37, 0
    %v99 = vsel %vm70, %v38, 0
    %v102 = vsel %vm70, %v39, 0
    %v105 = vsel %vm70, %v40, 0
    %v108 = vsel %vm70, %v41, 0
    %v111 = vsel %vm70, %v42, 0
    %v114 = vsel %vm70, %v43, 0
    %v117 = vsel %vm70, %v44, 0
    %v120 = vsel %vm70, %v45, 0
    %v123 = vsel %vm70, %v46, 0
    %v126 = vsel %vm70, %v47, 0
    %v129 = vsel %vm70, %v48, 0
    %v132 = vsel %vm70, %v49, 0
    %v135 = vsel %vm70, %v50, 0
    %v138 = vsel %vm70, %v51, 0
    %v141 = vsel %vm70, %v52, 0
    %v144 = vsel %vm70, %v53, 0
    %v147 = vsel %vm70, %v54, 0
    %v150 = vsel %vm70, %v55, 0
    %v153 = vsel %vm70, %v56, 0
    %v156 = vsel %vm70, %v57, 0
    %v159 = vsel %vm70, %v58, 0
    %v162 = vsel %vm70, %v59, 0
    %v165 = vsel %vm70, %v60, 0
    %167 = vmatprep.subr.mxu0 0.0
    %168 = vmatpush1.msra.mxu0 %v61
    %169 = vmatprep.subr.mxu0 0.0
    %170 = vmatpush1.msra.mxu0 %v62
    %171 = vmatprep.subr.mxu0 0.0
    %172 = vmatpush1.msra.mxu0 0.0
    %173 = vmatprep.subr.mxu0 0.0
    %174 = vmatpush1.msra.mxu0 0.0
    %175 = vmatprep.subr.mxu0 0.0
    %176 = vmatpush1.msra.mxu0 0.0
    %177 = vmatprep.subr.mxu0 0.0
    %178 = vmatpush1.msra.mxu0 0.0
    %179 = vmatprep.subr.mxu0 0.0
    %180 = vmatpush1.msra.mxu0 0.0
    %181 = vmatprep.subr.mxu0 0.0
    %182 = vmatpush1.msra.mxu0 0.0
    %183 = vmatprep.subr.mxu0 0.0
    %184 = vmatpush1.msra.mxu0 0.0
    %185 = vmatprep.subr.mxu0 0.0
    %186 = vmatpush1.msra.mxu0 0.0
    %187 = vmatprep.subr.mxu0 0.0
    %188 = vmatpush1.msra.mxu0 0.0
    %189 = vmatprep.subr.mxu0 0.0
    %190 = vmatpush1.msra.mxu0 0.0
    %191 = vmatprep.subr.mxu0 0.0
    %192 = vmatpush1.msra.mxu0 0.0
    %193 = vmatprep.subr.mxu0 0.0
    %194 = vmatpush1.msra.mxu0 0.0
    %195 = vmatprep.subr.mxu0 0.0
    %196 = vmatpush1.msra.mxu0 0.0
    %197 = vmatprep.subr.mxu0 0.0
    %198 = vmatpush1.msra.mxu0 0.0
    %199 = vmatprep.subr.mxu0 0.0
    %200 = vmatpush1.msra.mxu0 0.0
    %201 = vmatprep.subr.mxu0 0.0
    %202 = vmatpush1.msra.mxu0 0.0
    %203 = vmatprep.subr.mxu0 0.0
    %204 = vmatpush1.msra.mxu0 0.0
    %205 = vmatprep.subr.mxu0 0.0
    %206 = vmatpush1.msra.mxu0 0.0
    %207 = vmatprep.subr.mxu0 0.0
    %208 = vmatpush1.msra.mxu0 0.0
    %209 = vmatprep.subr.mxu0 0.0
    %210 = vmatpush1.msra.mxu0 0.0
    %211 = vmatprep.subr.mxu0 0.0
    %212 = vmatpush1.msra.mxu0 0.0
    %213 = vmatprep.subr.mxu0 0.0
    %214 = vmatpush1.msra.mxu0 0.0
    %215 = vmatprep.subr.mxu0 0.0
    %216 = vmatpush1.msra.mxu0 0.0
    %217 = vmatprep.subr.mxu0 0.0
    %218 = vmatpush1.msra.mxu0 0.0
    %219 = vmatprep.subr.mxu0 0.0
    %220 = vmatpush1.msra.mxu0 0.0
    %221 = vmatprep.subr.mxu0 0.0
    %222 = vmatpush1.msra.mxu0 0.0
    %223 = vmatprep.subr.mxu0 0.0
    %224 = vmatpush1.msra.mxu0 0.0
    %225 = vmatprep.subr.mxu0 0.0
    %226 = vmatpush1.msra.mxu0 0.0
    %227 = vmatprep.subr.mxu0 0.0
    %228 = vmatpush1.msra.mxu0 0.0
    %229 = vmatprep.subr.mxu0 0.0
    %230 = vmatpush1.msra.mxu0 0.0
    %231 = vmatprep.mubr.f32.mxu0 0.0
    %232 = vmatmul.mubr.f32.gmra.mrb[0].mxu0 %v72
    %v233 = vpop.f32.mrb[0].mxu0
    %v234 = vadd.f32 %v68, %v233
    %v235 = vpop.f32.mrb[0].mxu0
    %236 = vmatprep.mubr.f32.mxu0 0.0
    %237 = vmatmul.mubr.f32.gmra.mrb[0].mxu0 %v75
    %v238 = vpop.f32.mrb[0].mxu0
    %v239 = vadd.f32 %v68, %v238
    %v240 = vpop.f32.mrb[0].mxu0
    %241 = vmatprep.mubr.f32.mxu0 0.0
    %242 = vmatmul.mubr.f32.gmra.mrb[0].mxu0 %v78
    %v243 = vpop.f32.mrb[0].mxu0
    %v244 = vadd.f32 %v68, %v243
    %v245 = vpop.f32.mrb[0].mxu0
    %246 = vmatprep.mubr.f32.mxu0 0.0
    %247 = vmatmul.mubr.f32.gmra.mrb[0].mxu0 %v81
    %v248 = vpop.f32.mrb[0].mxu0
    %v249 = vadd.f32 %v68, %v248
    %v250 = vpop.f32.mrb[0].mxu0
    %251 = vmatprep.mubr.f32.mxu0 0.0
    %252 = vmatmul.mubr.f32.gmra.mrb[0].mxu0 %v84
    %v253 = vpop.f32.mrb[0].mxu0
    %v254 = vadd.f32 %v68, %v253
    %v255 = vpop.f32.mrb[0].mxu0
    %256 = vmatprep.mubr.f32.mxu0 0.0
    %257 = vmatmul.mubr.f32.gmra.mrb[0].mxu0 %v87
    %v258 = vpop.f32.mrb[0].mxu0
    %v259 = vadd.f32 %v68, %v258
    %v260 = vpop.f32.mrb[0].mxu0
    %261 = vmatprep.mubr.f32.mxu0 0.0
    %262 = vmatmul.mubr.f32.gmra.mrb[0].mxu0 %v90
    %v263 = vpop.f32.mrb[0].mxu0
    %v264 = vadd.f32 %v68, %v263
    %v265 = vpop.f32.mrb[0].mxu0
    %266 = vmatprep.mubr.f32.mxu0 0.0
    %267 = vmatmul.mubr.f32.gmra.mrb[0].mxu0 %v93
    %v268 = vpop.f32.mrb[0].mxu0
    %v269 = vadd.f32 %v68, %v268
    %v270 = vpop.f32.mrb[0].mxu0
    %271 = vmatprep.mubr.f32.mxu0 0.0
    %272 = vmatmul.mubr.f32.gmra.mrb[0].mxu0 %v96
    %v273 = vpop.f32.mrb[0].mxu0
    %v274 = vadd.f32 %v68, %v273
    %v275 = vpop.f32.mrb[0].mxu0
    %276 = vmatprep.mubr.f32.mxu0 0.0
    %277 = vmatmul.mubr.f32.gmra.mrb[0].mxu0 %v99
    %v278 = vpop.f32.mrb[0].mxu0
    %v279 = vadd.f32 %v68, %v278
    %v280 = vpop.f32.mrb[0].mxu0
    %281 = vmatprep.mubr.f32.mxu0 0.0
    %282 = vmatmul.mubr.f32.gmra.mrb[0].mxu0 %v102
    %v283 = vpop.f32.mrb[0].mxu0
    %v284 = vadd.f32 %v68, %v283
    %v285 = vpop.f32.mrb[0].mxu0
    %286 = vmatprep.mubr.f32.mxu0 0.0
    %287 = vmatmul.mubr.f32.gmra.mrb[0].mxu0 %v105
    %v288 = vpop.f32.mrb[0].mxu0
    %v289 = vadd.f32 %v68, %v288
    %v290 = vpop.f32.mrb[0].mxu0
    %291 = vmatprep.mubr.f32.mxu0 0.0
    %292 = vmatmul.mubr.f32.gmra.mrb[0].mxu0 %v108
    %v293 = vpop.f32.mrb[0].mxu0
    %v294 = vadd.f32 %v68, %v293
    %v295 = vpop.f32.mrb[0].mxu0
    %296 = vmatprep.mubr.f32.mxu0 0.0
    %297 = vmatmul.mubr.f32.gmra.mrb[0].mxu0 %v111
    %v298 = vpop.f32.mrb[0].mxu0
    %v299 = vadd.f32 %v68, %v298
    %v300 = vpop.f32.mrb[0].mxu0
    %301 = vmatprep.mubr.f32.mxu0 0.0
    %302 = vmatmul.mubr.f32.gmra.mrb[0].mxu0 %v114
    %v303 = vpop.f32.mrb[0].mxu0
    %v304 = vadd.f32 %v68, %v303
    %v305 = vpop.f32.mrb[0].mxu0
    %306 = vmatprep.mubr.f32.mxu0 0.0
    %307 = vmatmul.mubr.f32.gmra.mrb[0].mxu0 %v117
    %v308 = vpop.f32.mrb[0].mxu0
    %v309 = vadd.f32 %v68, %v308
    %v310 = vpop.f32.mrb[0].mxu0
    %311 = vmatprep.mubr.f32.mxu0 0.0
    %312 = vmatmul.mubr.f32.gmra.mrb[0].mxu0 %v120
    %v313 = vpop.f32.mrb[0].mxu0
    %v314 = vadd.f32 %v68, %v313
    %v315 = vpop.f32.mrb[0].mxu0
    %316 = vmatprep.mubr.f32.mxu0 0.0
    %317 = vmatmul.mubr.f32.gmra.mrb[0].mxu0 %v123
    %v318 = vpop.f32.mrb[0].mxu0
    %v319 = vadd.f32 %v68, %v318
    %v320 = vpop.f32.mrb[0].mxu0
    %321 = vmatprep.mubr.f32.mxu0 0.0
    %322 = vmatmul.mubr.f32.gmra.mrb[0].mxu0 %v126
    %v323 = vpop.f32.mrb[0].mxu0
    %v324 = vadd.f32 %v68, %v323
    %v325 = vpop.f32.mrb[0].mxu0
    %326 = vmatprep.mubr.f32.mxu0 0.0
    %327 = vmatmul.mubr.f32.gmra.mrb[0].mxu0 %v129
    %v328 = vpop.f32.mrb[0].mxu0
    %v329 = vadd.f32 %v68, %v328
    %v330 = vpop.f32.mrb[0].mxu0
    %331 = vmatprep.mubr.f32.mxu0 0.0
    %332 = vmatmul.mubr.f32.gmra.mrb[0].mxu0 %v132
    %v333 = vpop.f32.mrb[0].mxu0
    %v334 = vadd.f32 %v68, %v333
    %v335 = vpop.f32.mrb[0].mxu0
    %336 = vmatprep.mubr.f32.mxu0 0.0
    %337 = vmatmul.mubr.f32.gmra.mrb[0].mxu0 %v135
    %v338 = vpop.f32.mrb[0].mxu0
    %v339 = vadd.f32 %v68, %v338
    %v340 = vpop.f32.mrb[0].mxu0
    %341 = vmatprep.mubr.f32.mxu0 0.0
    %342 = vmatmul.mubr.f32.gmra.mrb[0].mxu0 %v138
    %v343 = vpop.f32.mrb[0].mxu0
    %v344 = vadd.f32 %v68, %v343
    %v345 = vpop.f32.mrb[0].mxu0
    %346 = vmatprep.mubr.f32.mxu0 0.0
    %347 = vmatmul.mubr.f32.gmra.mrb[0].mxu0 %v141
    %v348 = vpop.f32.mrb[0].mxu0
    %v349 = vadd.f32 %v68, %v348
    %v350 = vpop.f32.mrb[0].mxu0
    %351 = vmatprep.mubr.f32.mxu0 0.0
    %352 = vmatmul.mubr.f32.gmra.mrb[0].mxu0 %v144
    %v353 = vpop.f32.mrb[0].mxu0
    %v354 = vadd.f32 %v68, %v353
    %v355 = vpop.f32.mrb[0].mxu0
    %356 = vmatprep.mubr.f32.mxu0 0.0
    %357 = vmatmul.mubr.f32.gmra.mrb[0].mxu0 %v147
    %v358 = vpop.f32.mrb[0].mxu0
    %v359 = vadd.f32 %v68, %v358
    %v360 = vpop.f32.mrb[0].mxu0
    %361 = vmatprep.mubr.f32.mxu0 0.0
    %362 = vmatmul.mubr.f32.gmra.mrb[0].mxu0 %v150
    %v363 = vpop.f32.mrb[0].mxu0
    %v364 = vadd.f32 %v68, %v363
    %v365 = vpop.f32.mrb[0].mxu0
    %366 = vmatprep.mubr.f32.mxu0 0.0
    %367 = vmatmul.mubr.f32.gmra.mrb[0].mxu0 %v153
    %v368 = vpop.f32.mrb[0].mxu0
    %v369 = vadd.f32 %v68, %v368
    %v370 = vpop.f32.mrb[0].mxu0
    %371 = vmatprep.mubr.f32.mxu0 0.0
    %372 = vmatmul.mubr.f32.gmra.mrb[0].mxu0 %v156
    %v373 = vpop.f32.mrb[0].mxu0
    %v374 = vadd.f32 %v68, %v373
    %v375 = vpop.f32.mrb[0].mxu0
    %376 = vmatprep.mubr.f32.mxu0 0.0
    %377 = vmatmul.mubr.f32.gmra.mrb[0].mxu0 %v159
    %v378 = vpop.f32.mrb[0].mxu0
    %v379 = vadd.f32 %v68, %v378
    %v380 = vpop.f32.mrb[0].mxu0
    %381 = vmatprep.mubr.f32.mxu0 0.0
    %382 = vmatmul.mubr.f32.gmra.mrb[0].mxu0 %v162
    %v383 = vpop.f32.mrb[0].mxu0
    %v384 = vadd.f32 %v68, %v383
    %v385 = vpop.f32.mrb[0].mxu0
    %386 = vmatprep.mubr.f32.mxu0 0.0
    %387 = vmatmul.mubr.f32.gmra.mrb[0].mxu0 %v165
    %v388 = vpop.f32.mrb[0].mxu0
    %v389 = vadd.f32 %v68, %v388
    %v390 = vpop.f32.mrb[0].mxu0
    %391 = vdwg.mxu0
    %v392 = vmax.f32 %v234, 0.0
    %v393 = vmax.f32 %v239, 0.0
    %v394 = vmax.f32 %v244, 0.0
    %v395 = vmax.f32 %v249, 0.0
    %v396 = vmax.f32 %v254, 0.0
    %v397 = vmax.f32 %v259, 0.0
    %v398 = vmax.f32 %v264, 0.0
    %v399 = vmax.f32 %v269, 0.0
    %v400 = vmax.f32 %v274, 0.0
    %v401 = vmax.f32 %v279, 0.0
    %v402 = vmax.f32 %v284, 0.0
    %v403 = vmax.f32 %v289, 0.0
    %v404 = vmax.f32 %v294, 0.0
    %v405 = vmax.f32 %v299, 0.0
    %v406 = vmax.f32 %v304, 0.0
    %v407 = vmax.f32 %v309, 0.0
    %v408 = vmax.f32 %v314, 0.0
    %v409 = vmax.f32 %v319, 0.0
    %v410 = vmax.f32 %v324, 0.0
    %v411 = vmax.f32 %v329, 0.0
    %v412 = vmax.f32 %v334, 0.0
    %v413 = vmax.f32 %v339, 0.0
    %v414 = vmax.f32 %v344, 0.0
    %v415 = vmax.f32 %v349, 0.0
    %v416 = vmax.f32 %v354, 0.0
    %v417 = vmax.f32 %v359, 0.0
    %v418 = vmax.f32 %v364, 0.0
    %v419 = vmax.f32 %v369, 0.0
    %v420 = vmax.f32 %v374, 0.0
    %v421 = vmax.f32 %v379, 0.0
    %v422 = vmax.f32 %v384, 0.0
    %v423 = vmax.f32 %v389, 0.0
    %v424 = vld [vmem:[%s3] sm:$0xff]
    %v425 = vld [vmem:[%s3 + $0x8] sm:$0xff]
    %v426 = vld [vmem:[%s3 + $0x10] sm:$0xff]
    %v427 = vld [vmem:[%s3 + $0x18] sm:$0xff]
    %v428 = vld [vmem:[%s4] sm:$0x3]
    %v430 = vlaneseq
    %v431 = vshrl.u32 %v430, 7
    %v432 = vsub.s32 0, %v431
    %v433 = vrot.slane %v428, %v432
    %v434 = vlaneseq
    %v435 = vshrl.u32 %v434, 7
    %v436 = vsub.s32 1, %v435
    %v437 = vrot.slane %v428, %v436
    %v441 = vsel %vm70, %v392, 0
    %v444 = vsel %vm70, %v393, 0
    %v447 = vsel %vm70, %v394, 0
    %v450 = vsel %vm70, %v395, 0
    %v453 = vsel %vm70, %v396, 0
    %v456 = vsel %vm70, %v397, 0
    %v459 = vsel %vm70, %v398, 0
    %v462 = vsel %vm70, %v399, 0
    %v465 = vsel %vm70, %v400, 0
    %v468 = vsel %vm70, %v401, 0
    %v471 = vsel %vm70, %v402, 0
    %v474 = vsel %vm70, %v403, 0
    %v477 = vsel %vm70, %v404, 0
    %v480 = vsel %vm70, %v405, 0
    %v483 = vsel %vm70, %v406, 0
    %v486 = vsel %vm70, %v407, 0
    %v489 = vsel %vm70, %v408, 0
    %v492 = vsel %vm70, %v409, 0
    %v495 = vsel %vm70, %v410, 0
    %v498 = vsel %vm70, %v411, 0
    %v501 = vsel %vm70, %v412, 0
    %v504 = vsel %vm70, %v413, 0
    %v507 = vsel %vm70, %v414, 0
    %v510 = vsel %vm70, %v415, 0
    %v513 = vsel %vm70, %v416, 0
    %v516 = vsel %vm70, %v417, 0
    %v519 = vsel %vm70, %v418, 0
    %v522 = vsel %vm70, %v419, 0
    %v525 = vsel %vm70, %v420, 0
    %v528 = vsel %vm70, %v421, 0
    %v531 = vsel %vm70, %v422, 0
    %v534 = vsel %vm70, %v423, 0
    %536 = vmatprep.subr.mxu0 %v425
    %537 = vmatpush1.msra.mxu0 %v424
    %538 = vmatprep.subr.mxu0 %v427
    %539 = vmatpush1.msra.mxu0 %v426
    %540 = vmatprep.subr.mxu0 0.0
    %541 = vmatpush1.msra.mxu0 0.0
    %542 = vmatprep.subr.mxu0 0.0
    %543 = vmatpush1.msra.mxu0 0.0
    %544 = vmatprep.subr.mxu0 0.0
    %545 = vmatpush1.msra.mxu0 0.0
    %546 = vmatprep.subr.mxu0 0.0
    %547 = vmatpush1.msra.mxu0 0.0
    %548 = vmatprep.subr.mxu0 0.0
    %549 = vmatpush1.msra.mxu0 0.0
    %550 = vmatprep.subr.mxu0 0.0
    %551 = vmatpush1.msra.mxu0 0.0
    %552 = vmatprep.subr.mxu0 0.0
    %553 = vmatpush1.msra.mxu0 0.0
    %554 = vmatprep.subr.mxu0 0.0
    %555 = vmatpush1.msra.mxu0 0.0
    %556 = vmatprep.subr.mxu0 0.0
    %557 = vmatpush1.msra.mxu0 0.0
    %558 = vmatprep.subr.mxu0 0.0
    %559 = vmatpush1.msra.mxu0 0.0
    %560 = vmatprep.subr.mxu0 0.0
    %561 = vmatpush1.msra.mxu0 0.0
    %562 = vmatprep.subr.mxu0 0.0
    %563 = vmatpush1.msra.mxu0 0.0
    %564 = vmatprep.subr.mxu0 0.0
    %565 = vmatpush1.msra.mxu0 0.0
    %566 = vmatprep.subr.mxu0 0.0
    %567 = vmatpush1.msra.mxu0 0.0
    %568 = vmatprep.subr.mxu0 0.0
    %569 = vmatpush1.msra.mxu0 0.0
    %570 = vmatprep.subr.mxu0 0.0
    %571 = vmatpush1.msra.mxu0 0.0
    %572 = vmatprep.subr.mxu0 0.0
    %573 = vmatpush1.msra.mxu0 0.0
    %574 = vmatprep.subr.mxu0 0.0
    %575 = vmatpush1.msra.mxu0 0.0
    %576 = vmatprep.subr.mxu0 0.0
    %577 = vmatpush1.msra.mxu0 0.0
    %578 = vmatprep.subr.mxu0 0.0
    %579 = vmatpush1.msra.mxu0 0.0
    %580 = vmatprep.subr.mxu0 0.0
    %581 = vmatpush1.msra.mxu0 0.0
    %582 = vmatprep.subr.mxu0 0.0
    %583 = vmatpush1.msra.mxu0 0.0
    %584 = vmatprep.subr.mxu0 0.0
    %585 = vmatpush1.msra.mxu0 0.0
    %586 = vmatprep.subr.mxu0 0.0
    %587 = vmatpush1.msra.mxu0 0.0
    %588 = vmatprep.subr.mxu0 0.0
    %589 = vmatpush1.msra.mxu0 0.0
    %590 = vmatprep.subr.mxu0 0.0
    %591 = vmatpush1.msra.mxu0 0.0
    %592 = vmatprep.subr.mxu0 0.0
    %593 = vmatpush1.msra.mxu0 0.0
    %594 = vmatprep.subr.mxu0 0.0
    %595 = vmatpush1.msra.mxu0 0.0
    %596 = vmatprep.subr.mxu0 0.0
    %597 = vmatpush1.msra.mxu0 0.0
    %598 = vmatprep.subr.mxu0 0.0
    %599 = vmatpush1.msra.mxu0 0.0
    %600 = vmatprep.mubr.f32.mxu0 0.0
    %601 = vmatmul.mubr.f32.gmra.mrb[0].mxu0 %v441
    %v602 = vpop.f32.mrb[0].mxu0
    %v603 = vadd.f32 %v433, %v602
    %v604 = vpop.f32.mrb[0].mxu0
    %v605 = vadd.f32 %v437, %v604
    %606 = vmatprep.mubr.f32.mxu0 0.0
    %607 = vmatmul.mubr.f32.gmra.mrb[0].mxu0 %v444
    %v608 = vpop.f32.mrb[0].mxu0
    %v609 = vadd.f32 %v433, %v608
    %v610 = vpop.f32.mrb[0].mxu0
    %v611 = vadd.f32 %v437, %v610
    %612 = vmatprep.mubr.f32.mxu0 0.0
    %613 = vmatmul.mubr.f32.gmra.mrb[0].mxu0 %v447
    %v614 = vpop.f32.mrb[0].mxu0
    %v615 = vadd.f32 %v433, %v614
    %v616 = vpop.f32.mrb[0].mxu0
    %v617 = vadd.f32 %v437, %v616
    %618 = vmatprep.mubr.f32.mxu0 0.0
    %619 = vmatmul.mubr.f32.gmra.mrb[0].mxu0 %v450
    %v620 = vpop.f32.mrb[0].mxu0
    %v621 = vadd.f32 %v433, %v620
    %v622 = vpop.f32.mrb[0].mxu0
    %v623 = vadd.f32 %v437, %v622
    %624 = vmatprep.mubr.f32.mxu0 0.0
    %625 = vmatmul.mubr.f32.gmra.mrb[0].mxu0 %v453
    %v626 = vpop.f32.mrb[0].mxu0
    %v627 = vadd.f32 %v433, %v626
    %v628 = vpop.f32.mrb[0].mxu0
    %v629 = vadd.f32 %v437, %v628
    %630 = vmatprep.mubr.f32.mxu0 0.0
    %631 = vmatmul.mubr.f32.gmra.mrb[0].mxu0 %v456
    %v632 = vpop.f32.mrb[0].mxu0
    %v633 = vadd.f32 %v433, %v632
    %v634 = vpop.f32.mrb[0].mxu0
    %v635 = vadd.f32 %v437, %v634
    %636 = vmatprep.mubr.f32.mxu0 0.0
    %637 = vmatmul.mubr.f32.gmra.mrb[0].mxu0 %v459
    %v638 = vpop.f32.mrb[0].mxu0
    %v639 = vadd.f32 %v433, %v638
    %v640 = vpop.f32.mrb[0].mxu0
    %v641 = vadd.f32 %v437, %v640
    %642 = vmatprep.mubr.f32.mxu0 0.0
    %643 = vmatmul.mubr.f32.gmra.mrb[0].mxu0 %v462
    %v644 = vpop.f32.mrb[0].mxu0
    %v645 = vadd.f32 %v433, %v644
    %v646 = vpop.f32.mrb[0].mxu0
    %v647 = vadd.f32 %v437, %v646
    %648 = vmatprep.mubr.f32.mxu0 0.0
    %649 = vmatmul.mubr.f32.gmra.mrb[0].mxu0 %v465
    %v650 = vpop.f32.mrb[0].mxu0
    %v651 = vadd.f32 %v433, %v650
    %v652 = vpop.f32.mrb[0].mxu0
    %v653 = vadd.f32 %v437, %v652
    %654 = vmatprep.mubr.f32.mxu0 0.0
    %655 = vmatmul.mubr.f32.gmra.mrb[0].mxu0 %v468
    %v656 = vpop.f32.mrb[0].mxu0
    %v657 = vadd.f32 %v433, %v656
    %v658 = vpop.f32.mrb[0].mxu0
    %v659 = vadd.f32 %v437, %v658
    %660 = vmatprep.mubr.f32.mxu0 0.0
    %661 = vmatmul.mubr.f32.gmra.mrb[0].mxu0 %v471
    %v662 = vpop.f32.mrb[0].mxu0
    %v663 = vadd.f32 %v433, %v662
    %v664 = vpop.f32.mrb[0].mxu0
    %v665 = vadd.f32 %v437, %v664
    %666 = vmatprep.mubr.f32.mxu0 0.0
    %667 = vmatmul.mubr.f32.gmra.mrb[0].mxu0 %v474
    %v668 = vpop.f32.mrb[0].mxu0
    %v669 = vadd.f32 %v433, %v668
    %v670 = vpop.f32.mrb[0].mxu0
    %v671 = vadd.f32 %v437, %v670
    %672 = vmatprep.mubr.f32.mxu0 0.0
    %673 = vmatmul.mubr.f32.gmra.mrb[0].mxu0 %v477
    %v674 = vpop.f32.mrb[0].mxu0
    %v675 = vadd.f32 %v433, %v674
    %v676 = vpop.f32.mrb[0].mxu0
    %v677 = vadd.f32 %v437, %v676
    %678 = vmatprep.mubr.f32.mxu0 0.0
    %679 = vmatmul.mubr.f32.gmra.mrb[0].mxu0 %v480
    %v680 = vpop.f32.mrb[0].mxu0
    %v681 = vadd.f32 %v433, %v680
    %v682 = vpop.f32.mrb[0].mxu0
    %v683 = vadd.f32 %v437, %v682
    %684 = vmatprep.mubr.f32.mxu0 0.0
    %685 = vmatmul.mubr.f32.gmra.mrb[0].mxu0 %v483
    %v686 = vpop.f32.mrb[0].mxu0
    %v687 = vadd.f32 %v433, %v686
    %v688 = vpop.f32.mrb[0].mxu0
    %v689 = vadd.f32 %v437, %v688
    %690 = vmatprep.mubr.f32.mxu0 0.0
    %691 = vmatmul.mubr.f32.gmra.mrb[0].mxu0 %v486
    %v692 = vpop.f32.mrb[0].mxu0
    %v693 = vadd.f32 %v433, %v692
    %v694 = vpop.f32.mrb[0].mxu0
    %v695 = vadd.f32 %v437, %v694
    %696 = vmatprep.mubr.f32.mxu0 0.0
    %697 = vmatmul.mubr.f32.gmra.mrb[0].mxu0 %v489
    %v698 = vpop.f32.mrb[0].mxu0
    %v699 = vadd.f32 %v433, %v698
    %v700 = vpop.f32.mrb[0].mxu0
    %v701 = vadd.f32 %v437, %v700
    %702 = vmatprep.mubr.f32.mxu0 0.0
    %703 = vmatmul.mubr.f32.gmra.mrb[0].mxu0 %v492
    %v704 = vpop.f32.mrb[0].mxu0
    %v705 = vadd.f32 %v433, %v704
    %v706 = vpop.f32.mrb[0].mxu0
    %v707 = vadd.f32 %v437, %v706
    %708 = vmatprep.mubr.f32.mxu0 0.0
    %709 = vmatmul.mubr.f32.gmra.mrb[0].mxu0 %v495
    %v710 = vpop.f32.mrb[0].mxu0
    %v711 = vadd.f32 %v433, %v710
    %v712 = vpop.f32.mrb[0].mxu0
    %v713 = vadd.f32 %v437, %v712
    %714 = vmatprep.mubr.f32.mxu0 0.0
    %715 = vmatmul.mubr.f32.gmra.mrb[0].mxu0 %v498
    %v716 = vpop.f32.mrb[0].mxu0
    %v717 = vadd.f32 %v433, %v716
    %v718 = vpop.f32.mrb[0].mxu0
    %v719 = vadd.f32 %v437, %v718
    %720 = vmatprep.mubr.f32.mxu0 0.0
    %721 = vmatmul.mubr.f32.gmra.mrb[0].mxu0 %v501
    %v722 = vpop.f32.mrb[0].mxu0
    %v723 = vadd.f32 %v433, %v722
    %v724 = vpop.f32.mrb[0].mxu0
    %v725 = vadd.f32 %v437, %v724
    %726 = vmatprep.mubr.f32.mxu0 0.0
    %727 = vmatmul.mubr.f32.gmra.mrb[0].mxu0 %v504
    %v728 = vpop.f32.mrb[0].mxu0
    %v729 = vadd.f32 %v433, %v728
    %v730 = vpop.f32.mrb[0].mxu0
    %v731 = vadd.f32 %v437, %v730
    %732 = vmatprep.mubr.f32.mxu0 0.0
    %733 = vmatmul.mubr.f32.gmra.mrb[0].mxu0 %v507
    %v734 = vpop.f32.mrb[0].mxu0
    %v735 = vadd.f32 %v433, %v734
    %v736 = vpop.f32.mrb[0].mxu0
    %v737 = vadd.f32 %v437, %v736
    %738 = vmatprep.mubr.f32.mxu0 0.0
    %739 = vmatmul.mubr.f32.gmra.mrb[0].mxu0 %v510
    %v740 = vpop.f32.mrb[0].mxu0
    %v741 = vadd.f32 %v433, %v740
    %v742 = vpop.f32.mrb[0].mxu0
    %v743 = vadd.f32 %v437, %v742
    %744 = vmatprep.mubr.f32.mxu0 0.0
    %745 = vmatmul.mubr.f32.gmra.mrb[0].mxu0 %v513
    %v746 = vpop.f32.mrb[0].mxu0
    %v747 = vadd.f32 %v433, %v746
    %v748 = vpop.f32.mrb[0].mxu0
    %v749 = vadd.f32 %v437, %v748
    %750 = vmatprep.mubr.f32.mxu0 0.0
    %751 = vmatmul.mubr.f32.gmra.mrb[0].mxu0 %v516
    %v752 = vpop.f32.mrb[0].mxu0
    %v753 = vadd.f32 %v433, %v752
    %v754 = vpop.f32.mrb[0].mxu0
    %v755 = vadd.f32 %v437, %v754
    %756 = vmatprep.mubr.f32.mxu0 0.0
    %757 = vmatmul.mubr.f32.gmra.mrb[0].mxu0 %v519
    %v758 = vpop.f32.mrb[0].mxu0
    %v759 = vadd.f32 %v433, %v758
    %v760 = vpop.f32.mrb[0].mxu0
    %v761 = vadd.f32 %v437, %v760
    %762 = vmatprep.mubr.f32.mxu0 0.0
    %763 = vmatmul.mubr.f32.gmra.mrb[0].mxu0 %v522
    %v764 = vpop.f32.mrb[0].mxu0
    %v765 = vadd.f32 %v433, %v764
    %v766 = vpop.f32.mrb[0].mxu0
    %v767 = vadd.f32 %v437, %v766
    %768 = vmatprep.mubr.f32.mxu0 0.0
    %769 = vmatmul.mubr.f32.gmra.mrb[0].mxu0 %v525
    %v770 = vpop.f32.mrb[0].mxu0
    %v771 = vadd.f32 %v433, %v770
    %v772 = vpop.f32.mrb[0].mxu0
    %v773 = vadd.f32 %v437, %v772
    %774 = vmatprep.mubr.f32.mxu0 0.0
    %775 = vmatmul.mubr.f32.gmra.mrb[0].mxu0 %v528
    %v776 = vpop.f32.mrb[0].mxu0
    %v777 = vadd.f32 %v433, %v776
    %v778 = vpop.f32.mrb[0].mxu0
    %v779 = vadd.f32 %v437, %v778
    %780 = vmatprep.mubr.f32.mxu0 0.0
    %781 = vmatmul.mubr.f32.gmra.mrb[0].mxu0 %v531
    %v782 = vpop.f32.mrb[0].mxu0
    %v783 = vadd.f32 %v433, %v782
    %v784 = vpop.f32.mrb[0].mxu0
    %v785 = vadd.f32 %v437, %v784
    %786 = vmatprep.mubr.f32.mxu0 0.0
    %787 = vmatmul.mubr.f32.gmra.mrb[0].mxu0 %v534
    %v788 = vpop.f32.mrb[0].mxu0
    %v789 = vadd.f32 %v433, %v788
    %v790 = vpop.f32.mrb[0].mxu0
    %v791 = vadd.f32 %v437, %v790
    %792 = vdwg.mxu0
    %v793 = vmax.f32 %v603, 0.0
    %v794 = vmax.f32 %v605, 0.0
    %v795 = vmax.f32 %v609, 0.0
    %v796 = vmax.f32 %v611, 0.0
    %v797 = vmax.f32 %v615, 0.0
    %v798 = vmax.f32 %v617, 0.0
    %v799 = vmax.f32 %v621, 0.0
    %v800 = vmax.f32 %v623, 0.0
    %v801 = vmax.f32 %v627, 0.0
    %v802 = vmax.f32 %v629, 0.0
    %v803 = vmax.f32 %v633, 0.0
    %v804 = vmax.f32 %v635, 0.0
    %v805 = vmax.f32 %v639, 0.0
    %v806 = vmax.f32 %v641, 0.0
    %v807 = vmax.f32 %v645, 0.0
    %v808 = vmax.f32 %v647, 0.0
    %v809 = vmax.f32 %v651, 0.0
    %v810 = vmax.f32 %v653, 0.0
    %v811 = vmax.f32 %v657, 0.0
    %v812 = vmax.f32 %v659, 0.0
    %v813 = vmax.f32 %v663, 0.0
    %v814 = vmax.f32 %v665, 0.0
    %v815 = vmax.f32 %v669, 0.0
    %v816 = vmax.f32 %v671, 0.0
    %v817 = vmax.f32 %v675, 0.0
    %v818 = vmax.f32 %v677, 0.0
    %v819 = vmax.f32 %v681, 0.0
    %v820 = vmax.f32 %v683, 0.0
    %v821 = vmax.f32 %v687, 0.0
    %v822 = vmax.f32 %v689, 0.0
    %v823 = vmax.f32 %v693, 0.0
    %v824 = vmax.f32 %v695, 0.0
    %v825 = vmax.f32 %v699, 0.0
    %v826 = vmax.f32 %v701, 0.0
    %v827 = vmax.f32 %v705, 0.0
    %v828 = vmax.f32 %v707, 0.0
    %v829 = vmax.f32 %v711, 0.0
    %v830 = vmax.f32 %v713, 0.0
    %v831 = vmax.f32 %v717, 0.0
    %v832 = vmax.f32 %v719, 0.0
    %v833 = vmax.f32 %v723, 0.0
    %v834 = vmax.f32 %v725, 0.0
    %v835 = vmax.f32 %v729, 0.0
    %v836 = vmax.f32 %v731, 0.0
    %v837 = vmax.f32 %v735, 0.0
    %v838 = vmax.f32 %v737, 0.0
    %v839 = vmax.f32 %v741, 0.0
    %v840 = vmax.f32 %v743, 0.0
    %v841 = vmax.f32 %v747, 0.0
    %v842 = vmax.f32 %v749, 0.0
    %v843 = vmax.f32 %v753, 0.0
    %v844 = vmax.f32 %v755, 0.0
    %v845 = vmax.f32 %v759, 0.0
    %v846 = vmax.f32 %v761, 0.0
    %v847 = vmax.f32 %v765, 0.0
    %v848 = vmax.f32 %v767, 0.0
    %v849 = vmax.f32 %v771, 0.0
    %v850 = vmax.f32 %v773, 0.0
    %v851 = vmax.f32 %v777, 0.0
    %v852 = vmax.f32 %v779, 0.0
    %v853 = vmax.f32 %v783, 0.0
    %v854 = vmax.f32 %v785, 0.0
    %v855 = vmax.f32 %v789, 0.0
    %v856 = vmax.f32 %v791, 0.0
    %857 = vst [vmem:[#allocation2] sm:$0xff] %v793
    %858 = vst [vmem:[#allocation2 + $0x8] sm:$0xff] %v794
    %859 = vst [vmem:[#allocation2 + $0x10] sm:$0xff] %v795
    %860 = vst [vmem:[#allocation2 + $0x18] sm:$0xff] %v796
    %861 = vst [vmem:[#allocation2 + $0x20] sm:$0xff] %v797
    %862 = vst [vmem:[#allocation2 + $0x28] sm:$0xff] %v798
    %863 = vst [vmem:[#allocation2 + $0x30] sm:$0xff] %v799
    %864 = vst [vmem:[#allocation2 + $0x38] sm:$0xff] %v800
    %865 = vst [vmem:[#allocation2 + $0x40] sm:$0xff] %v801
    %866 = vst [vmem:[#allocation2 + $0x48] sm:$0xff] %v802
    %867 = vst [vmem:[#allocation2 + $0x50] sm:$0xff] %v803
    %868 = vst [vmem:[#allocation2 + $0x58] sm:$0xff] %v804
    %869 = vst [vmem:[#allocation2 + $0x60] sm:$0xff] %v805
    %870 = vst [vmem:[#allocation2 + $0x68] sm:$0xff] %v806
    %871 = vst [vmem:[#allocation2 + $0x70] sm:$0xff] %v807
    %872 = vst [vmem:[#allocation2 + $0x78] sm:$0xff] %v808
    %873 = vst [vmem:[#allocation2 + $0x80] sm:$0xff] %v809
    %874 = vst [vmem:[#allocation2 + $0x88] sm:$0xff] %v810
    %875 = vst [vmem:[#allocation2 + $0x90] sm:$0xff] %v811
    %876 = vst [vmem:[#allocation2 + $0x98] sm:$0xff] %v812
    %877 = vst [vmem:[#allocation2 + $0xa0] sm:$0xff] %v813
    %878 = vst [vmem:[#allocation2 + $0xa8] sm:$0xff] %v814
    %879 = vst [vmem:[#allocation2 + $0xb0] sm:$0xff] %v815
    %880 = vst [vmem:[#allocation2 + $0xb8] sm:$0xff] %v816
    %881 = vst [vmem:[#allocation2 + $0xc0] sm:$0xff] %v817
    %882 = vst [vmem:[#allocation2 + $0xc8] sm:$0xff] %v818
    %883 = vst [vmem:[#allocation2 + $0xd0] sm:$0xff] %v819
    %884 = vst [vmem:[#allocation2 + $0xd8] sm:$0xff] %v820
    %885 = vst [vmem:[#allocation2 + $0xe0] sm:$0xff] %v821
    %886 = vst [vmem:[#allocation2 + $0xe8] sm:$0xff] %v822
    %887 = vst [vmem:[#allocation2 + $0xf0] sm:$0xff] %v823
    %888 = vst [vmem:[#allocation2 + $0xf8] sm:$0xff] %v824
    %889 = vst [vmem:[#allocation2 + $0x100] sm:$0xff] %v825
    %890 = vst [vmem:[#allocation2 + $0x108] sm:$0xff] %v826
    %891 = vst [vmem:[#allocation2 + $0x110] sm:$0xff] %v827
    %892 = vst [vmem:[#allocation2 + $0x118] sm:$0xff] %v828
    %893 = vst [vmem:[#allocation2 + $0x120] sm:$0xff] %v829
    %894 = vst [vmem:[#allocation2 + $0x128] sm:$0xff] %v830
    %895 = vst [vmem:[#allocation2 + $0x130] sm:$0xff] %v831
    %896 = vst [vmem:[#allocation2 + $0x138] sm:$0xff] %v832
    %897 = vst [vmem:[#allocation2 + $0x140] sm:$0xff] %v833
    %898 = vst [vmem:[#allocation2 + $0x148] sm:$0xff] %v834
    %899 = vst [vmem:[#allocation2 + $0x150] sm:$0xff] %v835
    %900 = vst [vmem:[#allocation2 + $0x158] sm:$0xff] %v836
    %901 = vst [vmem:[#allocation2 + $0x160] sm:$0xff] %v837
    %902 = vst [vmem:[#allocation2 + $0x168] sm:$0xff] %v838
    %903 = vst [vmem:[#allocation2 + $0x170] sm:$0xff] %v839
    %904 = vst [vmem:[#allocation2 + $0x178] sm:$0xff] %v840
    %905 = vst [vmem:[#allocation2 + $0x180] sm:$0xff] %v841
    %906 = vst [vmem:[#allocation2 + $0x188] sm:$0xff] %v842
    %907 = vst [vmem:[#allocation2 + $0x190] sm:$0xff] %v843
    %908 = vst [vmem:[#allocation2 + $0x198] sm:$0xff] %v844
    %909 = vst [vmem:[#allocation2 + $0x1a0] sm:$0xff] %v845
    %910 = vst [vmem:[#allocation2 + $0x1a8] sm:$0xff] %v846
    %911 = vst [vmem:[#allocation2 + $0x1b0] sm:$0xff] %v847
    %912 = vst [vmem:[#allocation2 + $0x1b8] sm:$0xff] %v848
    %913 = vst [vmem:[#allocation2 + $0x1c0] sm:$0xff] %v849
    %914 = vst [vmem:[#allocation2 + $0x1c8] sm:$0xff] %v850
    %915 = vst [vmem:[#allocation2 + $0x1d0] sm:$0xff] %v851
    %916 = vst [vmem:[#allocation2 + $0x1d8] sm:$0xff] %v852
    %917 = vst [vmem:[#allocation2 + $0x1e0] sm:$0xff] %v853
    %918 = vst [vmem:[#allocation2 + $0x1e8] sm:$0xff] %v854
    %919 = vst [vmem:[#allocation2 + $0x1f0] sm:$0xff] %v855
    %920 = vst [vmem:[#allocation2 + $0x1f8] sm:$0xff] %v856
    %v921 = vld [vmem:[%s5] sm:$0xff]
    %v922 = vld [vmem:[%s5 + $0x8] sm:$0xff]
    %v923 = vld [vmem:[%s5 + $0x10] sm:$0xff]
    %v924 = vld [vmem:[%s5 + $0x18] sm:$0xff]
    %v925 = vld [vmem:[%s5 + $0x20] sm:$0xff]
    %v926 = vld [vmem:[%s5 + $0x28] sm:$0xff]
    %v927 = vld [vmem:[%s5 + $0x30] sm:$0xff]
    %v928 = vld [vmem:[%s5 + $0x38] sm:$0xff]
    %v929 = vld [vmem:[%s5 + $0x40] sm:$0xff]
    %v930 = vld [vmem:[%s5 + $0x48] sm:$0xff]
    %v931 = vld [vmem:[%s5 + $0x50] sm:$0xff]
    %v932 = vld [vmem:[%s5 + $0x58] sm:$0xff]
    %v933 = vld [vmem:[%s5 + $0x60] sm:$0xff]
    %v934 = vld [vmem:[%s5 + $0x68] sm:$0xff]
    %v935 = vld [vmem:[%s5 + $0x70] sm:$0xff]
    %v936 = vld [vmem:[%s5 + $0x78] sm:$0xff]
    %v937 = vld [vmem:[%s5 + $0x80] sm:$0xff]
    %v938 = vld [vmem:[%s5 + $0x88] sm:$0xff]
    %v939 = vld [vmem:[%s5 + $0x90] sm:$0xff]
    %v940 = vld [vmem:[%s5 + $0x98] sm:$0xff]
    %v941 = vld [vmem:[%s5 + $0xa0] sm:$0xff]
    %v942 = vld [vmem:[%s5 + $0xa8] sm:$0xff]
    %v943 = vld [vmem:[%s5 + $0xb0] sm:$0xff]
    %v944 = vld [vmem:[%s5 + $0xb8] sm:$0xff]
    %v945 = vld [vmem:[%s5 + $0xc0] sm:$0xff]
    %v946 = vld [vmem:[%s5 + $0xc8] sm:$0xff]
    %v947 = vld [vmem:[%s5 + $0xd0] sm:$0xff]
    %v948 = vld [vmem:[%s5 + $0xd8] sm:$0xff]
    %v949 = vld [vmem:[%s5 + $0xe0] sm:$0xff]
    %v950 = vld [vmem:[%s5 + $0xe8] sm:$0xff]
    %v951 = vld [vmem:[%s5 + $0xf0] sm:$0xff]
    %v952 = vld [vmem:[%s5 + $0xf8] sm:$0xff]
    %v953 = vld [vmem:[%s6] sm:$0x1]
    %v955 = vlaneseq
    %v956 = vshrl.u32 %v955, 7
    %v957 = vsub.s32 0, %v956
    %v958 = vrot.slane %v953, %v957
    %960 = vmatprep.subr.mxu0 0.0
    %961 = vmatpush1.msra.mxu0 %v921
    %962 = vmatprep.subr.mxu0 0.0
    %963 = vmatpush1.msra.mxu0 %v922
    %964 = vmatprep.subr.mxu0 0.0
    %965 = vmatpush1.msra.mxu0 %v923
    %966 = vmatprep.subr.mxu0 0.0
    %967 = vmatpush1.msra.mxu0 %v924
    %968 = vmatprep.subr.mxu0 0.0
    %969 = vmatpush1.msra.mxu0 %v925
    %970 = vmatprep.subr.mxu0 0.0
    %971 = vmatpush1.msra.mxu0 %v926
    %972 = vmatprep.subr.mxu0 0.0
    %973 = vmatpush1.msra.mxu0 %v927
    %974 = vmatprep.subr.mxu0 0.0
    %975 = vmatpush1.msra.mxu0 %v928
    %976 = vmatprep.subr.mxu0 0.0
    %977 = vmatpush1.msra.mxu0 %v929
    %978 = vmatprep.subr.mxu0 0.0
    %979 = vmatpush1.msra.mxu0 %v930
    %980 = vmatprep.subr.mxu0 0.0
    %981 = vmatpush1.msra.mxu0 %v931
    %982 = vmatprep.subr.mxu0 0.0
    %983 = vmatpush1.msra.mxu0 %v932
    %984 = vmatprep.subr.mxu0 0.0
    %985 = vmatpush1.msra.mxu0 %v933
    %986 = vmatprep.subr.mxu0 0.0
    %987 = vmatpush1.msra.mxu0 %v934
    %988 = vmatprep.subr.mxu0 0.0
    %989 = vmatpush1.msra.mxu0 %v935
    %990 = vmatprep.subr.mxu0 0.0
    %991 = vmatpush1.msra.mxu0 %v936
    %992 = vmatprep.subr.mxu0 0.0
    %993 = vmatpush1.msra.mxu0 %v937
    %994 = vmatprep.subr.mxu0 0.0
    %995 = vmatpush1.msra.mxu0 %v938
    %996 = vmatprep.subr.mxu0 0.0
    %997 = vmatpush1.msra.mxu0 %v939
    %998 = vmatprep.subr.mxu0 0.0
    %999 = vmatpush1.msra.mxu0 %v940
    %1000 = vmatprep.subr.mxu0 0.0
    %1001 = vmatpush1.msra.mxu0 %v941
    %1002 = vmatprep.subr.mxu0 0.0
    %1003 = vmatpush1.msra.mxu0 %v942
    %1004 = vmatprep.subr.mxu0 0.0
    %1005 = vmatpush1.msra.mxu0 %v943
    %1006 = vmatprep.subr.mxu0 0.0
    %1007 = vmatpush1.msra.mxu0 %v944
    %1008 = vmatprep.subr.mxu0 0.0
    %1009 = vmatpush1.msra.mxu0 %v945
    %1010 = vmatprep.subr.mxu0 0.0
    %1011 = vmatpush1.msra.mxu0 %v946
    %1012 = vmatprep.subr.mxu0 0.0
    %1013 = vmatpush1.msra.mxu0 %v947
    %1014 = vmatprep.subr.mxu0 0.0
    %1015 = vmatpush1.msra.mxu0 %v948
    %1016 = vmatprep.subr.mxu0 0.0
    %1017 = vmatpush1.msra.mxu0 %v949
    %1018 = vmatprep.subr.mxu0 0.0
    %1019 = vmatpush1.msra.mxu0 %v950
    %1020 = vmatprep.subr.mxu0 0.0
    %1021 = vmatpush1.msra.mxu0 %v951
    %1022 = vmatprep.subr.mxu0 0.0
    %1023 = vmatpush1.msra.mxu0 %v952
    %1024 = vmatprep.mubr.f32.mxu0 %v794
    %1025 = vmatmul.mubr.f32.gmra.mrb[0].mxu0 %v793
    %v1026 = vpop.f32.mrb[0].mxu0
    %v1027 = vadd.f32 %v958, %v1026
    %v1028 = vpop.f32.mrb[0].mxu0
    %1029 = vmatprep.mubr.f32.mxu0 %v796
    %1030 = vmatmul.mubr.f32.gmra.mrb[0].mxu0 %v795
    %v1031 = vpop.f32.mrb[0].mxu0
    %v1032 = vadd.f32 %v958, %v1031
    %v1033 = vpop.f32.mrb[0].mxu0
    %1034 = vmatprep.mubr.f32.mxu0 %v798
    %1035 = vmatmul.mubr.f32.gmra.mrb[0].mxu0 %v797
    %v1036 = vpop.f32.mrb[0].mxu0
    %v1037 = vadd.f32 %v958, %v1036
    %v1038 = vpop.f32.mrb[0].mxu0
    %1039 = vmatprep.mubr.f32.mxu0 %v800
    %1040 = vmatmul.mubr.f32.gmra.mrb[0].mxu0 %v799
    %v1041 = vpop.f32.mrb[0].mxu0
    %v1042 = vadd.f32 %v958, %v1041
    %v1043 = vpop.f32.mrb[0].mxu0
    %1044 = vmatprep.mubr.f32.mxu0 %v802
    %1045 = vmatmul.mubr.f32.gmra.mrb[0].mxu0 %v801
    %v1046 = vpop.f32.mrb[0].mxu0
    %v1047 = vadd.f32 %v958, %v1046
    %v1048 = vpop.f32.mrb[0].mxu0
    %1049 = vmatprep.mubr.f32.mxu0 %v804
    %1050 = vmatmul.mubr.f32.gmra.mrb[0].mxu0 %v803
    %v1051 = vpop.f32.mrb[0].mxu0
    %v1052 = vadd.f32 %v958, %v1051
    %v1053 = vpop.f32.mrb[0].mxu0
    %1054 = vmatprep.mubr.f32.mxu0 %v806
    %1055 = vmatmul.mubr.f32.gmra.mrb[0].mxu0 %v805
    %v1056 = vpop.f32.mrb[0].mxu0
    %v1057 = vadd.f32 %v958, %v1056
    %v1058 = vpop.f32.mrb[0].mxu0
    %1059 = vmatprep.mubr.f32.mxu0 %v808
    %1060 = vmatmul.mubr.f32.gmra.mrb[0].mxu0 %v807
    %v1061 = vpop.f32.mrb[0].mxu0
    %v1062 = vadd.f32 %v958, %v1061
    %v1063 = vpop.f32.mrb[0].mxu0
    %1064 = vmatprep.mubr.f32.mxu0 %v810
    %1065 = vmatmul.mubr.f32.gmra.mrb[0].mxu0 %v809
    %v1066 = vpop.f32.mrb[0].mxu0
    %v1067 = vadd.f32 %v958, %v1066
    %v1068 = vpop.f32.mrb[0].mxu0
    %1069 = vmatprep.mubr.f32.mxu0 %v812
    %1070 = vmatmul.mubr.f32.gmra.mrb[0].mxu0 %v811
    %v1071 = vpop.f32.mrb[0].mxu0
    %v1072 = vadd.f32 %v958, %v1071
    %v1073 = vpop.f32.mrb[0].mxu0
    %1074 = vmatprep.mubr.f32.mxu0 %v814
    %1075 = vmatmul.mubr.f32.gmra.mrb[0].mxu0 %v813
    %v1076 = vpop.f32.mrb[0].mxu0
    %v1077 = vadd.f32 %v958, %v1076
    %v1078 = vpop.f32.mrb[0].mxu0
    %1079 = vmatprep.mubr.f32.mxu0 %v816
    %1080 = vmatmul.mubr.f32.gmra.mrb[0].mxu0 %v815
    %v1081 = vpop.f32.mrb[0].mxu0
    %v1082 = vadd.f32 %v958, %v1081
    %v1083 = vpop.f32.mrb[0].mxu0
    %1084 = vmatprep.mubr.f32.mxu0 %v818
    %1085 = vmatmul.mubr.f32.gmra.mrb[0].mxu0 %v817
    %v1086 = vpop.f32.mrb[0].mxu0
    %v1087 = vadd.f32 %v958, %v1086
    %v1088 = vpop.f32.mrb[0].mxu0
    %1089 = vmatprep.mubr.f32.mxu0 %v820
    %1090 = vmatmul.mubr.f32.gmra.mrb[0].mxu0 %v819
    %v1091 = vpop.f32.mrb[0].mxu0
    %v1092 = vadd.f32 %v958, %v1091
    %v1093 = vpop.f32.mrb[0].mxu0
    %1094 = vmatprep.mubr.f32.mxu0 %v822
    %1095 = vmatmul.mubr.f32.gmra.mrb[0].mxu0 %v821
    %v1096 = vpop.f32.mrb[0].mxu0
    %v1097 = vadd.f32 %v958, %v1096
    %v1098 = vpop.f32.mrb[0].mxu0
    %1099 = vmatprep.mubr.f32.mxu0 %v824
    %1100 = vmatmul.mubr.f32.gmra.mrb[0].mxu0 %v823
    %v1101 = vpop.f32.mrb[0].mxu0
    %v1102 = vadd.f32 %v958, %v1101
    %v1103 = vpop.f32.mrb[0].mxu0
    %1104 = vmatprep.mubr.f32.mxu0 %v826
    %1105 = vmatmul.mubr.f32.gmra.mrb[0].mxu0 %v825
    %v1106 = vpop.f32.mrb[0].mxu0
    %v1107 = vadd.f32 %v958, %v1106
    %v1108 = vpop.f32.mrb[0].mxu0
    %1109 = vmatprep.mubr.f32.mxu0 %v828
    %1110 = vmatmul.mubr.f32.gmra.mrb[0].mxu0 %v827
    %v1111 = vpop.f32.mrb[0].mxu0
    %v1112 = vadd.f32 %v958, %v1111
    %v1113 = vpop.f32.mrb[0].mxu0
    %1114 = vmatprep.mubr.f32.mxu0 %v830
    %1115 = vmatmul.mubr.f32.gmra.mrb[0].mxu0 %v829
    %v1116 = vpop.f32.mrb[0].mxu0
    %v1117 = vadd.f32 %v958, %v1116
    %v1118 = vpop.f32.mrb[0].mxu0
    %1119 = vmatprep.mubr.f32.mxu0 %v832
    %1120 = vmatmul.mubr.f32.gmra.mrb[0].mxu0 %v831
    %v1121 = vpop.f32.mrb[0].mxu0
    %v1122 = vadd.f32 %v958, %v1121
    %v1123 = vpop.f32.mrb[0].mxu0
    %1124 = vmatprep.mubr.f32.mxu0 %v834
    %1125 = vmatmul.mubr.f32.gmra.mrb[0].mxu0 %v833
    %v1126 = vpop.f32.mrb[0].mxu0
    %v1127 = vadd.f32 %v958, %v1126
    %v1128 = vpop.f32.mrb[0].mxu0
    %1129 = vmatprep.mubr.f32.mxu0 %v836
    %1130 = vmatmul.mubr.f32.gmra.mrb[0].mxu0 %v835
    %v1131 = vpop.f32.mrb[0].mxu0
    %v1132 = vadd.f32 %v958, %v1131
    %v1133 = vpop.f32.mrb[0].mxu0
    %1134 = vmatprep.mubr.f32.mxu0 %v838
    %1135 = vmatmul.mubr.f32.gmra.mrb[0].mxu0 %v837
    %v1136 = vpop.f32.mrb[0].mxu0
    %v1137 = vadd.f32 %v958, %v1136
    %v1138 = vpop.f32.mrb[0].mxu0
    %1139 = vmatprep.mubr.f32.mxu0 %v840
    %1140 = vmatmul.mubr.f32.gmra.mrb[0].mxu0 %v839
    %v1141 = vpop.f32.mrb[0].mxu0
    %v1142 = vadd.f32 %v958, %v1141
    %v1143 = vpop.f32.mrb[0].mxu0
    %1144 = vmatprep.mubr.f32.mxu0 %v842
    %1145 = vmatmul.mubr.f32.gmra.mrb[0].mxu0 %v841
    %v1146 = vpop.f32.mrb[0].mxu0
    %v1147 = vadd.f32 %v958, %v1146
    %v1148 = vpop.f32.mrb[0].mxu0
    %1149 = vmatprep.mubr.f32.mxu0 %v844
    %1150 = vmatmul.mubr.f32.gmra.mrb[0].mxu0 %v843
    %v1151 = vpop.f32.mrb[0].mxu0
    %v1152 = vadd.f32 %v958, %v1151
    %v1153 = vpop.f32.mrb[0].mxu0
    %1154 = vmatprep.mubr.f32.mxu0 %v846
    %1155 = vmatmul.mubr.f32.gmra.mrb[0].mxu0 %v845
    %v1156 = vpop.f32.mrb[0].mxu0
    %v1157 = vadd.f32 %v958, %v1156
    %v1158 = vpop.f32.mrb[0].mxu0
    %1159 = vmatprep.mubr.f32.mxu0 %v848
    %1160 = vmatmul.mubr.f32.gmra.mrb[0].mxu0 %v847
    %v1161 = vpop.f32.mrb[0].mxu0
    %v1162 = vadd.f32 %v958, %v1161
    %v1163 = vpop.f32.mrb[0].mxu0
    %1164 = vmatprep.mubr.f32.mxu0 %v850
    %1165 = vmatmul.mubr.f32.gmra.mrb[0].mxu0 %v849
    %v1166 = vpop.f32.mrb[0].mxu0
    %v1167 = vadd.f32 %v958, %v1166
    %v1168 = vpop.f32.mrb[0].mxu0
    %1169 = vmatprep.mubr.f32.mxu0 %v852
    %1170 = vmatmul.mubr.f32.gmra.mrb[0].mxu0 %v851
    %v1171 = vpop.f32.mrb[0].mxu0
    %v1172 = vadd.f32 %v958, %v1171
    %v1173 = vpop.f32.mrb[0].mxu0
    %1174 = vmatprep.mubr.f32.mxu0 %v854
    %1175 = vmatmul.mubr.f32.gmra.mrb[0].mxu0 %v853
    %v1176 = vpop.f32.mrb[0].mxu0
    %v1177 = vadd.f32 %v958, %v1176
    %v1178 = vpop.f32.mrb[0].mxu0
    %1179 = vmatprep.mubr.f32.mxu0 %v856
    %1180 = vmatmul.mubr.f32.gmra.mrb[0].mxu0 %v855
    %v1181 = vpop.f32.mrb[0].mxu0
    %v1182 = vadd.f32 %v958, %v1181
    %v1183 = vpop.f32.mrb[0].mxu0
    %1184 = vdwg.mxu0
    %vm1185 = vcmask 261120
    %1186 = vst.msk [vmem:[%s7] sm:$0xff] %vm1185, %v1027
    %1187 = vst.msk [vmem:[%s7 + $0x8] sm:$0xff] %vm1185, %v1032
    %1188 = vst.msk [vmem:[%s7 + $0x10] sm:$0xff] %vm1185, %v1037
    %1189 = vst.msk [vmem:[%s7 + $0x18] sm:$0xff] %vm1185, %v1042
    %1190 = vst.msk [vmem:[%s7 + $0x20] sm:$0xff] %vm1185, %v1047
    %1191 = vst.msk [vmem:[%s7 + $0x28] sm:$0xff] %vm1185, %v1052
    %1192 = vst.msk [vmem:[%s7 + $0x30] sm:$0xff] %vm1185, %v1057
    %1193 = vst.msk [vmem:[%s7 + $0x38] sm:$0xff] %vm1185, %v1062
    %1194 = vst.msk [vmem:[%s7 + $0x40] sm:$0xff] %vm1185, %v1067
    %1195 = vst.msk [vmem:[%s7 + $0x48] sm:$0xff] %vm1185, %v1072
    %1196 = vst.msk [vmem:[%s7 + $0x50] sm:$0xff] %vm1185, %v1077
    %1197 = vst.msk [vmem:[%s7 + $0x58] sm:$0xff] %vm1185, %v1082
    %1198 = vst.msk [vmem:[%s7 + $0x60] sm:$0xff] %vm1185, %v1087
    %1199 = vst.msk [vmem:[%s7 + $0x68] sm:$0xff] %vm1185, %v1092
    %1200 = vst.msk [vmem:[%s7 + $0x70] sm:$0xff] %vm1185, %v1097
    %1201 = vst.msk [vmem:[%s7 + $0x78] sm:$0xff] %vm1185, %v1102
    %1202 = vst.msk [vmem:[%s7 + $0x80] sm:$0xff] %vm1185, %v1107
    %1203 = vst.msk [vmem:[%s7 + $0x88] sm:$0xff] %vm1185, %v1112
    %1204 = vst.msk [vmem:[%s7 + $0x90] sm:$0xff] %vm1185, %v1117
    %1205 = vst.msk [vmem:[%s7 + $0x98] sm:$0xff] %vm1185, %v1122
    %1206 = vst.msk [vmem:[%s7 + $0xa0] sm:$0xff] %vm1185, %v1127
    %1207 = vst.msk [vmem:[%s7 + $0xa8] sm:$0xff] %vm1185, %v1132
    %1208 = vst.msk [vmem:[%s7 + $0xb0] sm:$0xff] %vm1185, %v1137
    %1209 = vst.msk [vmem:[%s7 + $0xb8] sm:$0xff] %vm1185, %v1142
    %1210 = vst.msk [vmem:[%s7 + $0xc0] sm:$0xff] %vm1185, %v1147
    %1211 = vst.msk [vmem:[%s7 + $0xc8] sm:$0xff] %vm1185, %v1152
    %1212 = vst.msk [vmem:[%s7 + $0xd0] sm:$0xff] %vm1185, %v1157
    %1213 = vst.msk [vmem:[%s7 + $0xd8] sm:$0xff] %vm1185, %v1162
    %1214 = vst.msk [vmem:[%s7 + $0xe0] sm:$0xff] %vm1185, %v1167
    %1215 = vst.msk [vmem:[%s7 + $0xe8] sm:$0xff] %vm1185, %v1172
    %1216 = vst.msk [vmem:[%s7 + $0xf0] sm:$0xff] %vm1185, %v1177
    %1217 = vst.msk [vmem:[%s7 + $0xf8] sm:$0xff] %vm1185, %v1182
    // Predicated region
    $region30: #{tpu_custom_call.1} parent=1 // pred_check
      _
    $region31: #{tpu_custom_call.1} parent=1 // pred_check_branch
      %1219 = sbr.rel (0) target = $region33
    $region32: #{tpu_custom_call.1} parent=1 // pred_region
      _
    $region33: #{tpu_custom_call.1} parent=1 // pred_fallthru
      _
    // Predicated region
    $region34: #{tpu_custom_call.1} parent=1 // pred_check
      _
    $region35: #{tpu_custom_call.1} parent=1 // pred_check_branch
      %1221 = sbr.rel (0) target = $region37
    $region36: #{tpu_custom_call.1} parent=1 // pred_region
      %s1223 = ssub.s32 8192, 8192
      %1224 = vsyncadd [#allocation3], %s1223
      %s1225 = sshll.u32 [#allocation2], 4
      %s1226 = int_to_ptr.vmem [resolvable:$true] %s1225
      %1231 = dma.vmem_to_hbm [thread:$0]  %s1226, 8192, %s8, [#allocation3], 256, 256, 16
    $region37: #{tpu_custom_call.1} parent=1 // pred_fallthru
      _
    // Predicated region
    $region38: #{tpu_custom_call.1} parent=1 // pred_check
      _
    $region39: #{tpu_custom_call.1} parent=1 // pred_check_branch
      %1233 = sbr.rel (0) target = $region41
    $region40: #{tpu_custom_call.1} parent=1 // pred_region
      _
    $region41: #{tpu_custom_call.1} parent=1 // pred_fallthru
      _
    // Predicated region
    $region42: #{tpu_custom_call.1} parent=1 // pred_check
      _
    $region43: #{tpu_custom_call.1} parent=1 // pred_check_branch
      %1235 = sbr.rel (0) target = $region45
    $region44: #{tpu_custom_call.1} parent=1 // pred_region
      %1236 = dma.done [#allocation3], 8192
    $region45: #{tpu_custom_call.1} parent=1 // pred_fallthru
      _
    %1237 = vsyncpa [#allocation3], 1

</llo_original>
